<compile_context>
chip_gen: v5e
topology: v5e:2x2
jax: 0.10.0
libtpu: 0.0.40
codegen_flags: <defaults>
</compile_context>

<pallas_src>
import functools

import jax
import jax.numpy as jnp
from jax import lax
from jax.experimental import pallas as pl
from jax.experimental.pallas import tpu as pltpu


BN_EPS = 1e-5

# Batch tile for the two-pass (large-B) path.  Pass 2 streams (TILE_B, E) in and
# (TILE_B, D) out per grid step (~1.3 MiB at f32), comfortably amortizing the
# ~0.35 us fixed per-step overhead while its double-buffered working set (~4 MiB)
# fits even v7x's 64 MiB VMEM.
_TILE_B = 2048
# Pass 1 splits its batch tiles across a leading size-2 'parallel' axis so v7x's
# two TensorCores each accumulate partial statistics; on 1-TC chips this is the
# same total work plus one extra tiny accumulator writeback.
_STATS_SPLIT = 2
_STATS_TILE_B = _TILE_B // _STATS_SPLIT


def _vmem_capacity_bytes():
    """Physical VMEM of the local generation (v5e/v6e: 128 MiB, v7x: 64 MiB)."""
    try:
        cap = getattr(pltpu.get_tpu_info(), "vmem_capacity_bytes", None)
        if cap:
            return int(cap)
    except Exception:
        pass
    return 32 << 20  # conservative fallback (== default scoped limit on v6e/v7x)


def _fused_bytes_per_row(E, D, x_itemsize, out_itemsize):
    # double-buffered x block + double-buffered out block + f32 proj + f32 epilogue temp
    return 2 * E * x_itemsize + 2 * D * out_itemsize + 8 * D


# ----------------------------------------------------------------------------
# Kernels
# ----------------------------------------------------------------------------
def _fused_kernel(x_ref, w_ref, gamma_ref, beta_ref, out_ref):
    """Single-block path: projection + training-mode BatchNorm, fully fused.

    x_ref:     [B, E]   text features
    w_ref:     [E, D]   projection weight (pre-transposed; bias dropped: BN cancels it)
    gamma_ref: [1, D]   BN weight
    beta_ref:  [1, D]   BN bias
    out_ref:   [B, D]

    Batch statistics go through the MXU:
        col_sum   = ones[1,B] @ proj
        col_sumsq = sum_E( W * ((X^T X) @ W) )   # Gram form, no [B,D] proj^2 temp
    """
    x = x_ref[...]
    w = w_ref[...]
    w32 = w.astype(jnp.float32)

    proj = jnp.dot(x, w, preferred_element_type=jnp.float32)             # [B, D]

    n = x.shape[0]
    ones = jnp.ones((1, n), jnp.float32)
    col_sum = jnp.dot(ones, proj, preferred_element_type=jnp.float32)    # [1, D]
    gram = lax.dot_general(x, x, (((0,), (0,)), ((), ())),
                           preferred_element_type=jnp.float32)           # [E, E]
    gw = jnp.dot(gram, w32, preferred_element_type=jnp.float32)          # [E, D]
    col_sumsq = jnp.sum(w32 * gw, axis=0, keepdims=True)                 # [1, D]

    inv_n = 1.0 / n
    mean = col_sum * inv_n
    var = jnp.maximum(col_sumsq * inv_n - mean * mean, 0.0)   # biased (training) var
    scale = lax.rsqrt(var + BN_EPS) * gamma_ref[...]
    shift = beta_ref[...] - mean * scale
    out_ref[...] = (proj * scale + shift).astype(out_ref.dtype)


def _stats_kernel(x_ref, colsum_ref, gram_ref):
    """Pass 1 of the tiled path: accumulate colsum(X) [1,E] and X^T X [E,E].

    No projection matmul, no W DMA and no [TB, D] temporaries: the projection's
    column sum / sum-of-squares are recovered algebraically in pass 2 from these
    E-sized statistics.  Outputs are per-core partials (leading 'parallel' axis).
    """
    @pl.when(pl.program_id(1) == 0)
    def _init():
        colsum_ref[...] = jnp.zeros_like(colsum_ref)
        gram_ref[...] = jnp.zeros_like(gram_ref)

    x = x_ref[...]
    ones = jnp.ones((1, x.shape[0]), jnp.float32)
    colsum_ref[...] += jnp.dot(ones, x.astype(jnp.float32),
                               preferred_element_type=jnp.float32)        # [1, E]
    gram_ref[...] += lax.dot_general(x, x, (((0,), (0,)), ((), ())),
                                     preferred_element_type=jnp.float32)  # [E, E]


def _normalize_kernel(x_ref, w_ref, colsum_ref, gram_ref, gamma_ref, beta_ref,
                      out_ref, *, inv_n):
    """Pass 2 of the tiled path: recompute the cheap projection (E << D) and apply
    the BN affine.  The few-KiB per-core stat partials are reduced here, so no
    intermediate XLA op sits between the two pallas_calls."""
    w = w_ref[...]
    w32 = w.astype(jnp.float32)

    colsum_x = jnp.sum(colsum_ref[...], axis=0)                            # [1, E]
    gram = jnp.sum(gram_ref[...], axis=0)                                  # [E, E]
    col_sum = jnp.dot(colsum_x, w32, preferred_element_type=jnp.float32)   # [1, D]
    gw = jnp.dot(gram, w32, preferred_element_type=jnp.float32)            # [E, D]
    col_sumsq = jnp.sum(w32 * gw, axis=0, keepdims=True)                   # [1, D]

    mean = col_sum * inv_n
    var = jnp.maximum(col_sumsq * inv_n - mean * mean, 0.0)
    scale = lax.rsqrt(var + BN_EPS) * gamma_ref[...]
    shift = beta_ref[...] - mean * scale

    proj = jnp.dot(x_ref[...], w, preferred_element_type=jnp.float32)
    out_ref[...] = (proj * scale + shift).astype(out_ref.dtype)


# ----------------------------------------------------------------------------
# Wrappers
# ----------------------------------------------------------------------------
def prepare_params(params):
    """One-time parameter preprocessing, hoisted out of the per-call path.

    - weight stored pre-transposed as [E, D] (kernel computes X @ W_t),
    - gamma/beta reshaped lane-dense to [1, D],
    - Linear bias dropped: training-mode BN's mean subtraction cancels it exactly.
    """
    D, E = params["w"].shape
    return {
        "w_t": jnp.asarray(params["w"]).T,                     # [E, D]
        "gamma": jnp.asarray(params["gamma"]).reshape(1, D),
        "beta": jnp.asarray(params["beta"]).reshape(1, D),
    }


def _forward_fused(x, w_t, gamma, beta, out_dtype, vmem_cap):
    B, E = x.shape
    D = w_t.shape[1]
    per_row = _fused_bytes_per_row(E, D, x.dtype.itemsize, jnp.dtype(out_dtype).itemsize)
    est = B * per_row + (E * D + 2 * D) * 4
    vmem_limit = int(min(vmem_cap, max(16 << 20, est + (4 << 20))))
    return pl.pallas_call(
        _fused_kernel,
        out_shape=jax.ShapeDtypeStruct((B, D), out_dtype),
        grid=(1,),
        in_specs=[
            pl.BlockSpec((B, E), lambda i: (0, 0)),
            pl.BlockSpec((E, D), lambda i: (0, 0)),
            pl.BlockSpec((1, D), lambda i: (0, 0)),
            pl.BlockSpec((1, D), lambda i: (0, 0)),
        ],
        out_specs=pl.BlockSpec((B, D), lambda i: (0, 0)),
        compiler_params=pltpu.CompilerParams(
            dimension_semantics=("arbitrary",),
            vmem_limit_bytes=vmem_limit),
    )(x, w_t, gamma, beta)


def _forward_tiled(x, w_t, gamma, beta, out_dtype, vmem_cap):
    B, E = x.shape
    D = w_t.shape[1]

    # Zero-pad the batch to the tile multiple.  Padded rows project to exactly
    # zero (no Linear bias in the kernel), so they contribute nothing to either
    # statistic; inv_n stays 1/B_actual.
    pad_mult = _STATS_TILE_B * _STATS_SPLIT            # == _TILE_B
    B_pad = pl.cdiv(B, pad_mult) * pad_mult
    x_pad = x if B_pad == B else jnp.pad(x, ((0, B_pad - B), (0, 0)))

    tiles_per_split = B_pad // (_STATS_TILE_B * _STATS_SPLIT)

    def x_stats_map(c, i):
        return (c * tiles_per_split + i, 0)

    colsum, gram = pl.pallas_call(
        _stats_kernel,
        out_shape=(jax.ShapeDtypeStruct((_STATS_SPLIT, 1, E), jnp.float32),
                   jax.ShapeDtypeStruct((_STATS_SPLIT, E, E), jnp.float32)),
        grid=(_STATS_SPLIT, tiles_per_split),
        in_specs=[pl.BlockSpec((_STATS_TILE_B, E), x_stats_map)],
        out_specs=(pl.BlockSpec((None, 1, E), lambda c, i: (c, 0, 0)),
                   pl.BlockSpec((None, E, E), lambda c, i: (c, 0, 0))),
        compiler_params=pltpu.CompilerParams(
            dimension_semantics=("parallel", "arbitrary"),
            vmem_limit_bytes=int(min(vmem_cap, 16 << 20))),
    )(x_pad)

    # Pass 2: lane-dense, fully 'parallel' normalize.  Output shape is the real
    # (un-padded) B; Pallas masks the partial last block's out-of-range stores,
    # so no post-slice copy of the [B, D] result is paid.
    num_t2 = pl.cdiv(B, _TILE_B)
    return pl.pallas_call(
        functools.partial(_normalize_kernel, inv_n=1.0 / B),
        out_shape=jax.ShapeDtypeStruct((B, D), out_dtype),
        grid=(num_t2,),
        in_specs=[
            pl.BlockSpec((_TILE_B, E), lambda i: (i, 0)),
            pl.BlockSpec((E, D), lambda i: (0, 0)),
            pl.BlockSpec((_STATS_SPLIT, 1, E), lambda i: (0, 0, 0)),
            pl.BlockSpec((_STATS_SPLIT, E, E), lambda i: (0, 0, 0)),
            pl.BlockSpec((1, D), lambda i: (0, 0)),
            pl.BlockSpec((1, D), lambda i: (0, 0)),
        ],
        out_specs=pl.BlockSpec((_TILE_B, D), lambda i: (i, 0)),
        compiler_params=pltpu.CompilerParams(
            dimension_semantics=("parallel",),
            vmem_limit_bytes=int(min(vmem_cap, 24 << 20))),
    )(x_pad, w_t, colsum, gram, gamma, beta)


def condition_encoder_forward(text_features, prepared_params,
                              image_features=None, current_image_feat=None,
                              out_dtype=None, max_single_pass_batch=None):
    """Pallas forward pass for ConditionEncoder (training-mode BatchNorm).

    text_features: [B, embedding_dim]
    prepared_params: output of prepare_params()
    image_features: unused (the original forward ignores it)
    out_dtype: optional output dtype (e.g. jnp.bfloat16 to halve the dominant
        D-wide HBM writeback); all statistics stay f32.
    max_single_pass_batch: optional cutover override (mainly for testing).
    """
    del image_features  # unused by the original module's forward
    B, E = text_features.shape
    w_t = prepared_params["w_t"]
    gamma = prepared_params["gamma"]
    beta = prepared_params["beta"]
    D = w_t.shape[1]
    out_dtype = text_features.dtype if out_dtype is None else jnp.dtype(out_dtype)

    vmem_cap = _vmem_capacity_bytes()
    if max_single_pass_batch is None:
        # The fused single pass moves the fewest HBM bytes (X read once, no stats
        # round-trip) and costs one launch; keep it while its working set fits
        # comfortably in VMEM (~14K rows on v7x, ~21K on v5e/v6e at f32 in/out).
        budget = min(vmem_cap // 2, 48 << 20)
        per_row = _fused_bytes_per_row(E, D, text_features.dtype.itemsize,
                                       jnp.dtype(out_dtype).itemsize)
        max_single_pass_batch = max(_TILE_B, budget // per_row)

    if B <= max_single_pass_batch:
        fused = _forward_fused(text_features, w_t, gamma, beta, out_dtype, vmem_cap)
    else:
        fused = _forward_tiled(text_features, w_t, gamma, beta, out_dtype, vmem_cap)

    return fused, current_image_feat


# ----------------------------------------------------------------------------
# Parameter init & reference
# ----------------------------------------------------------------------------
def init_params(key, embedding_dim, projected_text_dim):
    """Deterministic synthetic parameters matching the module's shapes."""
    k_w, k_b = jax.random.split(key)
    bound = 1.0 / jnp.sqrt(embedding_dim)
    w = jax.random.uniform(
        k_w, (projected_text_dim, embedding_dim), jnp.float32, -bound, bound)
    b = jax.random.uniform(k_b, (projected_text_dim,), jnp.float32, -bound, bound)
    gamma = jnp.ones((projected_text_dim,), jnp.float32)
    beta = jnp.zeros((projected_text_dim,), jnp.float32)
    return {"w": w, "b": b, "gamma": gamma, "beta": beta}


def _reference(text_features, params):
    # Plain-JAX reference (training-mode BatchNorm1d, biased variance).
    # Includes the Linear bias; BN's mean subtraction cancels it, so the
    # bias-free kernel must match to fp rounding.
    proj = text_features @ params["w"].T + params["b"]
    mean = jnp.mean(proj, axis=0, keepdims=True)
    var = jnp.mean((proj - mean) ** 2, axis=0, keepdims=True)
    normed = (proj - mean) / jnp.sqrt(var + BN_EPS)
    return normed * params["gamma"] + params["beta"]


if __name__ == "__main__":
    # Shapes consistent with the module's forward:
    #   cfg.embedding_dim = 32, cfg.projected_text_dim = cfg.input_dim = 128
    EMBEDDING_DIM = 32
    PROJECTED_TEXT_DIM = 128

    key = jax.random.PRNGKey(0)
    k_params, k_text_s, k_text_r, k_img = jax.random.split(key, 4)

    params = init_params(k_params, EMBEDDING_DIM, PROJECTED_TEXT_DIM)
    prepared = prepare_params(params)   # one-time: transpose + reshapes hoisted

    # --- small batch: single fused-block path --------------------------------
    B_small = 8
    text_small = jax.random.normal(k_text_s, (B_small, EMBEDDING_DIM), jnp.float32)
    current_image_feat = jax.random.normal(k_img, (B_small, 4, 16, 16), jnp.float32)

    fused_s, img_out = condition_encoder_forward(
        text_small, prepared, image_features=None,
        current_image_feat=current_image_feat)
    fused_s = jax.block_until_ready(fused_s)
    img_out = jax.block_until_ready(img_out)

    ref_s = _reference(text_small, params)
    assert fused_s.shape == (B_small, PROJECTED_TEXT_DIM)
    assert img_out.shape == current_image_feat.shape
    assert jnp.allclose(fused_s, ref_s, atol=1e-4, rtol=1e-4), "small-batch mismatch"

    # --- ragged batch, tiled two-pass path forced (exercises padding, the
    #     per-core stats split and the masked partial output block) -----------
    B_ragged = 3000   # not a multiple of the 2048-row tile
    text_ragged = jax.random.normal(k_text_r, (B_ragged, EMBEDDING_DIM), jnp.float32)
    fused_r, _ = condition_encoder_forward(
        text_ragged, prepared, max_single_pass_batch=0)
    fused_r = jax.block_until_ready(fused_r)

    ref_r = _reference(text_ragged, params)
    assert fused_r.shape == (B_ragged, PROJECTED_TEXT_DIM)
    assert jnp.allclose(fused_r, ref_r, atol=1e-4, rtol=1e-4), "tiled-path mismatch"

    print("KERNEL_OK")
</pallas_src>

<mosaic_0001>
module attributes {stable_mosaic.version = 11 : i64} {
  func.func @_fused_kernel(%arg0: i32, %arg1: memref<8x32xf32, #tpu.memory_space<vmem>>, %arg2: memref<32x128xf32, #tpu.memory_space<vmem>>, %arg3: memref<1x128xf32, #tpu.memory_space<vmem>>, %arg4: memref<1x128xf32, #tpu.memory_space<vmem>>, %arg5: memref<8x128xf32, #tpu.memory_space<vmem>>) attributes {dimension_semantics = [#tpu.dimension_semantics<arbitrary>], iteration_bounds = array<i64: 1>, scalar_prefetch = 0 : i64, scratch_operands = 0 : i64, tpu.core_type = #tpu.core_type<tc>, window_params = [{pipeline_mode = #tpu.pipeline_mode<synchronous>, transform_indices = @transform_0, window_bounds = array<i64: 8, 32>}, {pipeline_mode = #tpu.pipeline_mode<synchronous>, transform_indices = @transform_1, window_bounds = array<i64: 32, 128>}, {pipeline_mode = #tpu.pipeline_mode<synchronous>, transform_indices = @transform_2, window_bounds = array<i64: 1, 128>}, {pipeline_mode = #tpu.pipeline_mode<synchronous>, transform_indices = @transform_3, window_bounds = array<i64: 1, 128>}, {pipeline_mode = #tpu.pipeline_mode<synchronous>, transform_indices = @transform_4, window_bounds = array<i64: 8, 128>}]} {
    %c0 = arith.constant 0 : index
    %c0_0 = arith.constant 0 : index
    %0 = vector.load %arg1[%c0, %c0_0] : memref<8x32xf32, #tpu.memory_space<vmem>>, vector<8x32xf32>
    %c0_1 = arith.constant 0 : index
    %c0_2 = arith.constant 0 : index
    %1 = vector.load %arg2[%c0_1, %c0_2] : memref<32x128xf32, #tpu.memory_space<vmem>>, vector<32x128xf32>
    %cst = arith.constant dense<0.000000e+00> : vector<8x128xf32>
    %2 = tpu.matmul %0, %1, %cst {dimension_numbers = #tpu.dot_dimension_numbers<[1], [0], [0], [1], [0, 0, 1, 1], [], []>} : vector<8x32xf32>, vector<32x128xf32>, vector<8x128xf32> -> vector<8x128xf32>
    %cst_3 = arith.constant 1.000000e+00 : f32
    %3 = vector.broadcast %cst_3 : f32 to vector<1x8xf32>
    %cst_4 = arith.constant dense<0.000000e+00> : vector<1x128xf32>
    %4 = tpu.matmul %3, %2, %cst_4 {dimension_numbers = #tpu.dot_dimension_numbers<[1], [0], [0], [1], [0, 0, 1, 1], [], []>} : vector<1x8xf32>, vector<8x128xf32>, vector<1x128xf32> -> vector<1x128xf32>
    %cst_5 = arith.constant dense<0.000000e+00> : vector<32x32xf32>
    %5 = tpu.matmul %0, %0, %cst_5 {dimension_numbers = #tpu.dot_dimension_numbers<[0], [0], [1], [1], [0, 1, 1, 1], [], []>} : vector<8x32xf32>, vector<8x32xf32>, vector<32x32xf32> -> vector<32x32xf32>
    %cst_6 = arith.constant dense<0.000000e+00> : vector<32x128xf32>
    %6 = tpu.matmul %5, %1, %cst_6 {dimension_numbers = #tpu.dot_dimension_numbers<[1], [0], [0], [1], [0, 0, 1, 1], [], []>} : vector<32x32xf32>, vector<32x128xf32>, vector<32x128xf32> -> vector<32x128xf32>
    %7 = arith.mulf %1, %6 : vector<32x128xf32>
    %cst_7 = arith.constant dense<0.000000e+00> : vector<128xf32>
    %8 = vector.multi_reduction <add>, %7, %cst_7 [0] : vector<32x128xf32> to vector<128xf32>
    %9 = vector.shape_cast %8 : vector<128xf32> to vector<1x128xf32>
    %cst_8 = arith.constant 1.250000e-01 : f32
    %10 = vector.broadcast %cst_8 : f32 to vector<1x128xf32>
    %11 = arith.mulf %4, %10 : vector<1x128xf32>
    %cst_9 = arith.constant 1.250000e-01 : f32
    %12 = vector.broadcast %cst_9 : f32 to vector<1x128xf32>
    %13 = arith.mulf %9, %12 : vector<1x128xf32>
    %14 = arith.mulf %11, %11 : vector<1x128xf32>
    %15 = arith.subf %13, %14 : vector<1x128xf32>
    %cst_10 = arith.constant 0.000000e+00 : f32
    %16 = vector.broadcast %cst_10 : f32 to vector<1x128xf32>
    %17 = arith.maximumf %15, %16 : vector<1x128xf32>
    %cst_11 = arith.constant 9.99999974E-6 : f32
    %18 = vector.broadcast %cst_11 : f32 to vector<1x128xf32>
    %19 = arith.addf %17, %18 : vector<1x128xf32>
    %20 = math.rsqrt %19 : vector<1x128xf32>
    %c0_12 = arith.constant 0 : index
    %c0_13 = arith.constant 0 : index
    %21 = vector.load %arg3[%c0_12, %c0_13] : memref<1x128xf32, #tpu.memory_space<vmem>>, vector<1x128xf32>
    %22 = arith.mulf %20, %21 : vector<1x128xf32>
    %c0_14 = arith.constant 0 : index
    %c0_15 = arith.constant 0 : index
    %23 = vector.load %arg4[%c0_14, %c0_15] : memref<1x128xf32, #tpu.memory_space<vmem>>, vector<1x128xf32>
    %24 = arith.mulf %11, %22 : vector<1x128xf32>
    %25 = arith.subf %23, %24 : vector<1x128xf32>
    %26 = vector.broadcast %22 : vector<1x128xf32> to vector<8x128xf32>
    %27 = arith.mulf %2, %26 : vector<8x128xf32>
    %28 = vector.broadcast %25 : vector<1x128xf32> to vector<8x128xf32>
    %29 = arith.addf %27, %28 : vector<8x128xf32>
    %c0_16 = arith.constant 0 : index
    %c0_17 = arith.constant 0 : index
    %30 = vector.load %arg5[%c0_16, %c0_17] : memref<8x128xf32, #tpu.memory_space<vmem>>, vector<8x128xf32>
    tpu.vector_store %arg5[%c0_16, %c0_17], %29 {strides = array<i32>} : memref<8x128xf32, #tpu.memory_space<vmem>>, vector<8x128xf32>,
    return
  }
  func.func @transform_0(%arg0: i32) -> (i32, i32) {
    %c0_i32 = arith.constant 0 : i32
    %c0_i32_0 = arith.constant 0 : i32
    %c0_i32_1 = arith.constant 0 : i32
    return %c0_i32, %c0_i32_0 : i32, i32
  }
  func.func @transform_1(%arg0: i32) -> (i32, i32) {
    %c0_i32 = arith.constant 0 : i32
    %c0_i32_0 = arith.constant 0 : i32
    %c0_i32_1 = arith.constant 0 : i32
    return %c0_i32, %c0_i32_0 : i32, i32
  }
  func.func @transform_2(%arg0: i32) -> (i32, i32) {
    %c0_i32 = arith.constant 0 : i32
    %c0_i32_0 = arith.constant 0 : i32
    %c0_i32_1 = arith.constant 0 : i32
    return %c0_i32, %c0_i32_0 : i32, i32
  }
  func.func @transform_3(%arg0: i32) -> (i32, i32) {
    %c0_i32 = arith.constant 0 : i32
    %c0_i32_0 = arith.constant 0 : i32
    %c0_i32_1 = arith.constant 0 : i32
    return %c0_i32, %c0_i32_0 : i32, i32
  }
  func.func @transform_4(%arg0: i32) -> (i32, i32) {
    %c0_i32 = arith.constant 0 : i32
    %c0_i32_0 = arith.constant 0 : i32
    %c0_i32_1 = arith.constant 0 : i32
    return %c0_i32, %c0_i32_0 : i32, i32
  }
}

</mosaic_0001>

<llo_original>
// kernel: tpu_custom_call.1
$region0: #{tpu_custom_call.1}
  #allocation0 [shape = 'u32[]', space=smem, size = 0x4, offset = 0x4, fixed_abs, tag = 'smem constant byte address 0x4 - core index']
  #allocation1 [shape = 'u32[72,128]{1,0:T(1,128)}', space=vmem, size = 0x9000, scoped, tag = 'internal scratch']
  %s0 = inlined_call_operand.hbm [shape: f32[8,32], index: 0, kind: input, shape index: {}]
  %s1 = inlined_call_operand.hbm [shape: f32[32,128], index: 1, kind: input, shape index: {}]
  %s2 = inlined_call_operand.vmem [shape: f32[1,128], index: 2, kind: input, shape index: {}]
  %s3 = inlined_call_operand.vmem [shape: f32[1,128], index: 3, kind: input, shape index: {}]
  %s4 = inlined_call_operand.hbm [shape: f32[8,128], index: 4, kind: output, shape index: {}]
  %s5 = sld [smem:[#allocation0]]
  $region34: #{tpu_custom_call.1} parent=0
    _
  %s7 = ssub.s32 1, %s5
  %s8 = scalar_select 0, %s7, %s5
  $region1: #{tpu_custom_call.1} parent=0
    #allocation2 [shape = 'u8[4096]{0}', space=vmem, size = 0x1000, scoped, tag = 'input window, operand 0, single buffered']
    #allocation3 [shape = 's32[1]{0}', space=sflag, size = 0x4, scoped, tag = 'scoped memory for tpu_custom_call.1']
    #allocation4 [shape = 's32[1]{0}', space=sflag, size = 0x4, scoped, tag = 'scoped memory for tpu_custom_call.1']
    #allocation5 [shape = 'u8[16384]{0}', space=vmem, size = 0x4000, scoped, tag = 'input window, operand 1, single buffered']
    #allocation6 [shape = 's32[1]{0}', space=sflag, size = 0x4, scoped, tag = 'scoped memory for tpu_custom_call.1']
    #allocation7 [shape = 'u8[4096]{0}', space=vmem, size = 0x1000, scoped, tag = 'output window, operand 0, single buffered']
    %9 = vsyncpa [#allocation3], 0
    %10 = vsyncpa [#allocation6], 0
    %11 = vsyncpa [#allocation4], 0
    // Predicated region
    $region2: #{tpu_custom_call.1} parent=1 // pred_check
      _
    $region3: #{tpu_custom_call.1} parent=1 // pred_check_branch
      %13 = sbr.rel (0) target = $region5
    $region4: #{tpu_custom_call.1} parent=1 // pred_region
      %15 = vsyncadd [#allocation3], 0
      %s17 = sshll.u32 %s0, 4
      %s18 = int_to_ptr.hbm [resolvable:$true] %s17
      %s19 = sshll.u32 [#allocation2], 4
      %s20 = int_to_ptr.vmem [resolvable:$true] %s19
      %22 = dma.hbm_to_vmem [thread:$0]  %s18, 128, %s20, [#allocation3]
    $region5: #{tpu_custom_call.1} parent=1 // pred_fallthru
      _
    // Predicated region
    $region6: #{tpu_custom_call.1} parent=1 // pred_check
      _
    $region7: #{tpu_custom_call.1} parent=1 // pred_check_branch
      %24 = sbr.rel (0) target = $region9
    $region8: #{tpu_custom_call.1} parent=1 // pred_region
      %26 = vsyncadd [#allocation6], 0
      %s27 = sshll.u32 %s1, 4
      %s28 = int_to_ptr.hbm [resolvable:$true] %s27
      %s29 = sshll.u32 [#allocation5], 4
      %s30 = int_to_ptr.vmem [resolvable:$true] %s29
      %35 = dma.hbm_to_vmem [thread:$0]  %s28, 512, %s30, [#allocation6], 128, 128, 8
    $region9: #{tpu_custom_call.1} parent=1 // pred_fallthru
      _
    // Predicated region
    $region10: #{tpu_custom_call.1} parent=1 // pred_check
      _
    $region11: #{tpu_custom_call.1} parent=1 // pred_check_branch
      %37 = sbr.rel (0) target = $region13
    $region12: #{tpu_custom_call.1} parent=1 // pred_region
      _
    $region13: #{tpu_custom_call.1} parent=1 // pred_fallthru
      _
    // Predicated region
    $region14: #{tpu_custom_call.1} parent=1 // pred_check
      _
    $region15: #{tpu_custom_call.1} parent=1 // pred_check_branch
      %39 = sbr.rel (0) target = $region17
    $region16: #{tpu_custom_call.1} parent=1 // pred_region
      _
    $region17: #{tpu_custom_call.1} parent=1 // pred_fallthru
      _
    // Predicated region
    $region18: #{tpu_custom_call.1} parent=1 // pred_check
      _
    $region19: #{tpu_custom_call.1} parent=1 // pred_check_branch
      %41 = sbr.rel (0) target = $region21
    $region20: #{tpu_custom_call.1} parent=1 // pred_region
      %43 = dma.done [#allocation3], 128
    $region21: #{tpu_custom_call.1} parent=1 // pred_fallthru
      _
    // Predicated region
    $region22: #{tpu_custom_call.1} parent=1 // pred_check
      _
    $region23: #{tpu_custom_call.1} parent=1 // pred_check_branch
      %45 = sbr.rel (0) target = $region25
    $region24: #{tpu_custom_call.1} parent=1 // pred_region
      %47 = dma.done [#allocation6], 512
    $region25: #{tpu_custom_call.1} parent=1 // pred_fallthru
      _
    %v48 = vld [vmem:[#allocation2] sm:$0xff]
    %v49 = vld [vmem:[#allocation5] sm:$0xff]
    %v50 = vld [vmem:[#allocation5 + $0x8] sm:$0xff]
    %v51 = vld [vmem:[#allocation5 + $0x10] sm:$0xff]
    %v52 = vld [vmem:[#allocation5 + $0x18] sm:$0xff]
    %vm53 = vcmask 261120
    %v55 = vsel %vm53, %v48, 0
    %57 = vmatpush.msra.mxu0 0.0
    %58 = vmatpush.msra.mxu0 0.0
    %59 = vmatpush.msra.mxu0 0.0
    %60 = vmatpush.msra.mxu0 0.0
    %61 = vmatpush.msra.mxu0 0.0
    %62 = vmatpush.msra.mxu0 0.0
    %63 = vmatpush.msra.mxu0 0.0
    %64 = vmatpush.msra.mxu0 0.0
    %65 = vmatpush.msra.mxu0 0.0
    %66 = vmatpush.msra.mxu0 0.0
    %67 = vmatpush.msra.mxu0 0.0
    %68 = vmatpush.msra.mxu0 0.0
    %69 = vmatpush.msra.mxu0 %v52
    %70 = vmatpush.msra.mxu0 %v51
    %71 = vmatpush.msra.mxu0 %v50
    %72 = vmatpush.msra.mxu0 %v49
    %73 = vmatmul.f32.gmra.mxu0 %v55
    %v74 = vpop.f32.mrf.mxu0
    %v75 = vadd.f32 0.0, %v74
    %76 = vdwg.mxu0
    %vm77 = vcmask 64512
    %v79 = vsel %vm77, 1.0, 0
    %81 = vmatpush.msra.mxu0 0.0
    %82 = vmatpush.msra.mxu0 0.0
    %83 = vmatpush.msra.mxu0 0.0
    %84 = vmatpush.msra.mxu0 0.0
    %85 = vmatpush.msra.mxu0 0.0
    %86 = vmatpush.msra.mxu0 0.0
    %87 = vmatpush.msra.mxu0 0.0
    %88 = vmatpush.msra.mxu0 0.0
    %89 = vmatpush.msra.mxu0 0.0
    %90 = vmatpush.msra.mxu0 0.0
    %91 = vmatpush.msra.mxu0 0.0
    %92 = vmatpush.msra.mxu0 0.0
    %93 = vmatpush.msra.mxu0 0.0
    %94 = vmatpush.msra.mxu0 0.0
    %95 = vmatpush.msra.mxu0 0.0
    %96 = vmatpush.msra.mxu0 %v75
    %97 = vmatmul.f32.gmra.mxu0 %v79
    %v98 = vpop.f32.mrf.mxu0
    %v99 = vadd.f32 0.0, %v98
    %100 = vdwg.mxu0
    %101 = vxpose.xlu0.b32.start [1/16] %v48, 128
    %102 = vxpose.xlu0.b32.cont [2/16] 0.0, 128
    %103 = vxpose.xlu0.b32.cont [3/16] 0.0, 128
    %104 = vxpose.xlu0.b32.cont [4/16] 0.0, 128
    %105 = vxpose.xlu0.b32.cont [5/16] 0.0, 128
    %106 = vxpose.xlu0.b32.cont [6/16] 0.0, 128
    %107 = vxpose.xlu0.b32.cont [7/16] 0.0, 128
    %108 = vxpose.xlu0.b32.cont [8/16] 0.0, 128
    %109 = vxpose.xlu0.b32.cont [9/16] 0.0, 128
    %110 = vxpose.xlu0.b32.cont [10/16] 0.0, 128
    %111 = vxpose.xlu0.b32.cont [11/16] 0.0, 128
    %112 = vxpose.xlu0.b32.cont [12/16] 0.0, 128
    %113 = vxpose.xlu0.b32.cont [13/16] 0.0, 128
    %114 = vxpose.xlu0.b32.cont [14/16] 0.0, 128
    %115 = vxpose.xlu0.b32.cont [15/16] 0.0, 128
    %116 = vxpose.xlu0.b32.end [16/16] 0.0, 128
    %v117 = vpop.trf.xlu0
    %v118 = vpop.trf.xlu0
    %v119 = vpop.trf.xlu0
    %v120 = vpop.trf.xlu0
    %v121 = vpop.trf.xlu0
    %v122 = vpop.trf.xlu0
    %v123 = vpop.trf.xlu0
    %v124 = vpop.trf.xlu0
    %v125 = vpop.trf.xlu0
    %v126 = vpop.trf.xlu0
    %v127 = vpop.trf.xlu0
    %v128 = vpop.trf.xlu0
    %v129 = vpop.trf.xlu0
    %v130 = vpop.trf.xlu0
    %v131 = vpop.trf.xlu0
    %v132 = vpop.trf.xlu0
    %v134 = vsel %vm77, %v117, 0
    %v137 = vsel %vm77, %v118, 0
    %v140 = vsel %vm77, %v119, 0
    %v143 = vsel %vm77, %v120, 0
    %145 = vmatpush.msra.mxu0 0.0
    %146 = vmatpush.msra.mxu0 0.0
    %147 = vmatpush.msra.mxu0 0.0
    %148 = vmatpush.msra.mxu0 0.0
    %149 = vmatpush.msra.mxu0 0.0
    %150 = vmatpush.msra.mxu0 0.0
    %151 = vmatpush.msra.mxu0 0.0
    %152 = vmatpush.msra.mxu0 0.0
    %153 = vmatpush.msra.mxu0 0.0
    %154 = vmatpush.msra.mxu0 0.0
    %155 = vmatpush.msra.mxu0 0.0
    %156 = vmatpush.msra.mxu0 0.0
    %157 = vmatpush.msra.mxu0 0.0
    %158 = vmatpush.msra.mxu0 0.0
    %159 = vmatpush.msra.mxu0 0.0
    %160 = vmatpush.msra.mxu0 %v48
    %161 = vmatmul.f32.gmra.mxu0 %v134
    %v162 = vpop.f32.mrf.mxu0
    %v163 = vadd.f32 0.0, %v162
    %164 = vmatmul.f32.gmra.mxu0 %v137
    %v165 = vpop.f32.mrf.mxu0
    %v166 = vadd.f32 0.0, %v165
    %167 = vmatmul.f32.gmra.mxu0 %v140
    %v168 = vpop.f32.mrf.mxu0
    %v169 = vadd.f32 0.0, %v168
    %170 = vmatmul.f32.gmra.mxu0 %v143
    %v171 = vpop.f32.mrf.mxu0
    %v172 = vadd.f32 0.0, %v171
    %173 = vdwg.mxu0
    %v175 = vsel %vm53, %v163, 0
    %v178 = vsel %vm53, %v166, 0
    %v181 = vsel %vm53, %v169, 0
    %v184 = vsel %vm53, %v172, 0
    %186 = vmatpush.msra.mxu0 0.0
    %187 = vmatpush.msra.mxu0 0.0
    %188 = vmatpush.msra.mxu0 0.0
    %189 = vmatpush.msra.mxu0 0.0
    %190 = vmatpush.msra.mxu0 0.0
    %191 = vmatpush.msra.mxu0 0.0
    %192 = vmatpush.msra.mxu0 0.0
    %193 = vmatpush.msra.mxu0 0.0
    %194 = vmatpush.msra.mxu0 0.0
    %195 = vmatpush.msra.mxu0 0.0
    %196 = vmatpush.msra.mxu0 0.0
    %197 = vmatpush.msra.mxu0 0.0
    %198 = vmatpush.msra.mxu0 %v52
    %199 = vmatpush.msra.mxu0 %v51
    %200 = vmatpush.msra.mxu0 %v50
    %201 = vmatpush.msra.mxu0 %v49
    %202 = vmatmul.f32.gmra.mxu0 %v175
    %v203 = vpop.f32.mrf.mxu0
    %v204 = vadd.f32 0.0, %v203
    %205 = vmatmul.f32.gmra.mxu0 %v178
    %v206 = vpop.f32.mrf.mxu0
    %v207 = vadd.f32 0.0, %v206
    %208 = vmatmul.f32.gmra.mxu0 %v181
    %v209 = vpop.f32.mrf.mxu0
    %v210 = vadd.f32 0.0, %v209
    %211 = vmatmul.f32.gmra.mxu0 %v184
    %v212 = vpop.f32.mrf.mxu0
    %v213 = vadd.f32 0.0, %v212
    %214 = vdwg.mxu0
    %v215 = vmul.f32 %v49, %v204
    %v216 = vmul.f32 %v50, %v207
    %v217 = vmul.f32 %v51, %v210
    %v218 = vmul.f32 %v52, %v213
    %v219 = vadd.f32 %v215, %v216
    %v220 = vadd.f32 %v219, %v217
    %v221 = vadd.f32 %v220, %v218
    %v222 = vrot.slane %v221, 4
    %v223 = vadd.f32 %v221, %v222
    %v224 = vrot.slane %v223, 2
    %v225 = vadd.f32 %v223, %v224
    %v226 = vrot.slane %v225, 1
    %v227 = vadd.f32 %v225, %v226
    %v228 = vmul.f32 %v99, 0.125
    %v229 = vmul.f32 %v227, 0.125
    %v230 = vmul.f32 %v228, %v228
    %v231 = vsub.f32 %v229, %v230
    %v232 = vmax.f32 %v231, 0.0
    %v233 = vadd.f32 %v232, 1e-05
    %v234 = vrsqrt.pop %v233
    %v235 = vmul.f32 %v234, %v233
    %v236 = vmul.f32 %v235, %v234
    %v237 = vmul.f32 0.5, %v236
    %v238 = vsub.f32 1.5, %v237
    %v239 = vmul.f32 %v234, %v238
    %vm240 = vweird.f32 %v233
    %vm241 = vweird.f32 %v234
    %vm242 = vmor %vm240, %vm241
    %v243 = vsel %vm242, %v234, %v239
    %v244 = vld [vmem:[%s2] sm:$0x1]
    %v245 = vmul.f32 %v243, %v244
    %v246 = vld [vmem:[%s3] sm:$0x1]
    %v247 = vmul.f32 %v228, %v245
    %v248 = vsub.f32 %v246, %v247
    %v249 = vperm.slane %v245, 0
    %v250 = vmul.f32 %v75, %v249
    %v252 = vperm.slane %v248, 0
    %v254 = vadd.f32 %v250, %v252
    %255 = vst [vmem:[#allocation7] sm:$0xff] %v254
    // Predicated region
    $region26: #{tpu_custom_call.1} parent=1 // pred_check
      _
    $region27: #{tpu_custom_call.1} parent=1 // pred_check_branch
      %257 = sbr.rel (0) target = $region29
    $region28: #{tpu_custom_call.1} parent=1 // pred_region
      %259 = vsyncadd [#allocation4], 0
      %s261 = sshll.u32 [#allocation7], 4
      %s262 = int_to_ptr.vmem [resolvable:$true] %s261
      %s263 = sshll.u32 %s4, 4
      %s264 = int_to_ptr.hbm [resolvable:$true] %s263
      %266 = dma.vmem_to_hbm [thread:$0]  %s262, 128, %s264, [#allocation4]
    $region29: #{tpu_custom_call.1} parent=1 // pred_fallthru
      _
    // Predicated region
    $region30: #{tpu_custom_call.1} parent=1 // pred_check
      _
    $region31: #{tpu_custom_call.1} parent=1 // pred_check_branch
      %268 = sbr.rel (0) target = $region33
    $region32: #{tpu_custom_call.1} parent=1 // pred_region
      %270 = dma.done [#allocation4], 128
    $region33: #{tpu_custom_call.1} parent=1 // pred_fallthru
      _
    %271 = vsyncpa [#allocation3], 1
    %272 = vsyncpa [#allocation6], 1
    %273 = vsyncpa [#allocation4], 1

</llo_original>
